<compile_context>
chip_gen: v7x
topology: tpu7x:2x2x1
jax: 0.10.0
libtpu: 0.0.40
codegen_flags: <defaults>
</compile_context>

<pallas_src>
import functools

import jax
import jax.numpy as jnp
from jax import lax
from jax.experimental import pallas as pl
from jax.experimental.pallas import tpu as pltpu


def _round_up(x, m):
    return (x + m - 1) // m * m


def _gru_stack(n_layers, Hp, x_bf16, h0, wi, wh, w4, bi3, b4, bhn):
    """GRU cell applied n_layers times; layer 0 uses x, later layers use x == h."""
    # ---- layer 0: x != h  -> two fused (Hp, 3Hp) matmuls (gate order r|z|n) ----------
    # gh is issued first so it does not wait on the embedding-gather matmul result.
    gh = jnp.dot(h0.astype(jnp.bfloat16), wh, preferred_element_type=jnp.float32)
    gi = jnp.dot(x_bf16, wi, preferred_element_type=jnp.float32) + bi3
    r = jax.nn.sigmoid(gi[:, 0:Hp] + gh[:, 0:Hp])
    z = jax.nn.sigmoid(gi[:, Hp:2 * Hp] + gh[:, Hp:2 * Hp])
    n = jnp.tanh(gi[:, 2 * Hp:3 * Hp] + r * (gh[:, 2 * Hp:3 * Hp] + bhn))
    h = (1.0 - z) * n + z * h0

    if n_layers > 1:
        # ---- layers 1..n-1: x == h -> single fused (Hp, 4Hp) matmul -------------------
        def inner(_, hh):
            g = jnp.dot(hh.astype(jnp.bfloat16), w4,
                        preferred_element_type=jnp.float32) + b4
            r = jax.nn.sigmoid(g[:, 0:Hp])
            z = jax.nn.sigmoid(g[:, Hp:2 * Hp])
            n = jnp.tanh(g[:, 2 * Hp:3 * Hp] + r * g[:, 3 * Hp:4 * Hp])
            return (1.0 - z) * n + z * hh

        h = lax.fori_loop(1, n_layers, inner, h, unroll=n_layers <= 8)
    return h


def _encoder_kernel_onehot(n_layers, Hp, Vp,
                           tok_ref,   # VMEM (TS, 1)   int32
                           emb_ref,   # VMEM (Vp, Hp)  bf16   [resident]
                           h0_ref,    # VMEM (TS, Hp)  f32
                           wi_ref,    # VMEM (Hp, 3Hp) bf16   [resident]
                           wh_ref,    # VMEM (Hp, 3Hp) bf16   [resident]
                           w4_ref,    # VMEM (Hp, 4Hp) bf16   [resident]
                           bi_ref,    # VMEM (1, 3Hp)  f32
                           b4_ref,    # VMEM (1, 4Hp)  f32
                           bhn_ref,   # VMEM (1, Hp)   f32
                           out_ref):  # VMEM (TS, Hp)  f32
    TS = tok_ref.shape[0]
    # Embedding gather as a one-hot bf16 MXU matmul against the VMEM-resident table.
    eq = tok_ref[...] == lax.broadcasted_iota(jnp.int32, (TS, Vp), 1)
    onehot = jnp.where(eq, 1.0, 0.0).astype(jnp.bfloat16)
    x = jnp.dot(onehot, emb_ref[...],
                preferred_element_type=jnp.float32).astype(jnp.bfloat16)
    out_ref[...] = _gru_stack(
        n_layers, Hp, x, h0_ref[...],
        wi_ref[...], wh_ref[...], w4_ref[...],
        bi_ref[...], b4_ref[...], bhn_ref[...]).astype(out_ref.dtype)


def _encoder_kernel_gathered(n_layers, Hp,
                             x_ref,     # VMEM (TS, Hp) bf16  [pre-gathered in wrapper]
                             h0_ref, wi_ref, wh_ref, w4_ref, bi_ref, b4_ref, bhn_ref,
                             out_ref):
    out_ref[...] = _gru_stack(
        n_layers, Hp, x_ref[...], h0_ref[...],
        wi_ref[...], wh_ref[...], w4_ref[...],
        bi_ref[...], b4_ref[...], bhn_ref[...]).astype(out_ref.dtype)


class EncoderRnnPallas:
    """Pallas-TPU equivalent of the PyTorch EncoderRnn forward pass."""

    def __init__(self, input_size, hidden_size, n_layers=1, key=jax.random.PRNGKey(0)):
        self.input_size = int(input_size)
        self.hidden_size = int(hidden_size)
        self.n_layers = int(n_layers)

        H, V = self.hidden_size, self.input_size
        Hp = _round_up(max(H, 128), 128)          # lane-pad hidden dim
        Vp = _round_up(max(V, 8), 128)            # pad vocab for the one-hot matmul
        self._Hp, self._Vp = Hp, Vp
        # One-hot MXU gather only while the bf16 table stays comfortably VMEM-resident
        # and the one-hot matmul FLOPs stay modest; otherwise gather in the wrapper.
        self._use_onehot = (Vp * Hp * 2) <= (2 << 20) and Vp <= 4096

        k_emb, k_wi, k_wh, k_bi, k_bh = jax.random.split(key, 5)
        bound = 1.0 / float(H) ** 0.5
        # PyTorch-equivalent raw parameters (f32, un-padded), kept for the reference.
        self.embedding = jax.random.normal(k_emb, (V, H), jnp.float32)   # nn.Embedding ~ N(0,1)
        self.weight_ih = jax.random.uniform(k_wi, (3 * H, H), jnp.float32, -bound, bound)
        self.weight_hh = jax.random.uniform(k_wh, (3 * H, H), jnp.float32, -bound, bound)
        self.bias_ih = jax.random.uniform(k_bi, (3 * H,), jnp.float32, -bound, bound)
        self.bias_hh = jax.random.uniform(k_bh, (3 * H,), jnp.float32, -bound, bound)

        # ---- kernel-ready parameters, built ONCE (hoisted out of __call__) -----------
        self._emb_p = (jnp.zeros((Vp, Hp), jnp.float32)
                       .at[:V, :H].set(self.embedding)).astype(jnp.bfloat16)

        def gate_blocks_T(w):    # PyTorch (3H, H) -> three padded (Hp, Hp) "x @ W" blocks
            blocks = []
            for g in range(3):
                wg = w[g * H:(g + 1) * H, :].T                       # (H, H)
                blocks.append(jnp.zeros((Hp, Hp), jnp.float32).at[:H, :H].set(wg))
            return blocks

        wiT = gate_blocks_T(self.weight_ih)
        whT = gate_blocks_T(self.weight_hh)
        self._wi = jnp.concatenate(wiT, axis=1).astype(jnp.bfloat16)          # (Hp, 3Hp)
        self._wh = jnp.concatenate(whT, axis=1).astype(jnp.bfloat16)          # (Hp, 3Hp)
        # inner layers have x == h: fuse into [Wi_r+Wh_r | Wi_z+Wh_z | Wi_n | Wh_n]
        self._w4 = jnp.concatenate(
            [wiT[0] + whT[0], wiT[1] + whT[1], wiT[2], whT[2]],
            axis=1).astype(jnp.bfloat16)                                      # (Hp, 4Hp)

        def pad_vec(b):
            return jnp.zeros((Hp,), jnp.float32).at[:H].set(b)

        b_r = pad_vec(self.bias_ih[0:H] + self.bias_hh[0:H])
        b_z = pad_vec(self.bias_ih[H:2 * H] + self.bias_hh[H:2 * H])
        b_in = pad_vec(self.bias_ih[2 * H:3 * H])
        b_hn = pad_vec(self.bias_hh[2 * H:3 * H])
        self._bi3 = jnp.concatenate([b_r, b_z, b_in]).reshape(1, 3 * Hp)
        self._b4 = jnp.concatenate([b_r, b_z, b_in, b_hn]).reshape(1, 4 * Hp)
        self._bhn = b_hn.reshape(1, Hp)

    def __call__(self, input_ids, hidden):
        """input_ids: int32 (S,) token ids; hidden: float32 (1, S, H).

        Returns (output, hidden), each (1, S, H) — matching the PyTorch module
        (seq_len == 1 after the permute, so output == new hidden).
        """
        S = input_ids.shape[0]
        H, Hp, Vp = self.hidden_size, self._Hp, self._Vp

        # Rows per grid step: large enough to amortize per-step overhead, multiple of 16
        # for bf16 sublane packing of the matmul LHS, but capped so realistic S still
        # spans >= 2 grid steps (megacore "parallel" sharding).
        TS = _round_up(min(max(S, 16), 512), 16)
        if S > 256:
            TS = min(TS, _round_up((S + 1) // 2, 16))
        Sp = _round_up(S, TS)
        grid = (Sp // TS,)

        tok = jnp.zeros((Sp, 1), jnp.int32).at[:S, 0].set(input_ids.astype(jnp.int32))
        h0 = jnp.zeros((Sp, Hp), jnp.float32).at[:S, :H].set(
            hidden.reshape(S, H).astype(jnp.float32))

        def resident(shape):
            return pl.BlockSpec(shape, lambda i: (0, 0))

        common_specs = [
            pl.BlockSpec((TS, Hp), lambda i: (i, 0)),        # h0 tile
            resident((Hp, 3 * Hp)),                          # layer-0 W_i (resident)
            resident((Hp, 3 * Hp)),                          # layer-0 W_h (resident)
            resident((Hp, 4 * Hp)),                          # fused inner-layer W
            resident((1, 3 * Hp)),                           # fused r|z|n biases
            resident((1, 4 * Hp)),                           # fused inner-layer biases
            resident((1, Hp)),                               # b_hn
        ]
        common_args = (h0, self._wi, self._wh, self._w4,
                       self._bi3, self._b4, self._bhn)

        if self._use_onehot:
            kernel = functools.partial(_encoder_kernel_onehot, self.n_layers, Hp, Vp)
            in_specs = [pl.BlockSpec((TS, 1), lambda i: (i, 0)),   # token ids
                        resident((Vp, Hp))] + common_specs          # bf16 emb table
            args = (tok, self._emb_p) + common_args
            table_bytes = Vp * Hp * 2
        else:
            # Large vocab: gather once in the wrapper, stream bf16 rows into VMEM.
            x = jnp.take(self._emb_p, tok[:, 0], axis=0)            # (Sp, Hp) bf16
            kernel = functools.partial(_encoder_kernel_gathered, self.n_layers, Hp)
            in_specs = [pl.BlockSpec((TS, Hp), lambda i: (i, 0))] + common_specs
            args = (x,) + common_args
            table_bytes = 0

        weight_bytes = 2 * (3 * Hp * Hp + 3 * Hp * Hp + 4 * Hp * Hp)   # bf16 weights
        tile_bytes = TS * Hp * 10 + 4 * 8 * Hp                         # act tiles + biases
        vmem_limit = int(min(max(2 * (weight_bytes + table_bytes + tile_bytes)
                                 + (2 << 20), 32 << 20), 100 << 20))

        out = pl.pallas_call(
            kernel,
            out_shape=jax.ShapeDtypeStruct((Sp, Hp), jnp.float32),
            grid=grid,
            in_specs=in_specs,
            out_specs=pl.BlockSpec((TS, Hp), lambda i: (i, 0)),
            compiler_params=pltpu.CompilerParams(
                dimension_semantics=("parallel",),
                vmem_limit_bytes=vmem_limit),
        )(*args)

        res = out[:S, :H].reshape(1, S, H)
        return res, res     # output and hidden are identical for seq_len == 1

    def init_hidden(self, batch=1):
        return jnp.zeros((1, batch, self.hidden_size), jnp.float32)


def _reference_forward(model, input_ids, hidden):
    """Pure-JAX (f32) reference of the PyTorch forward, for correctness checking."""
    H = model.hidden_size
    x = model.embedding[input_ids]                      # (S, H)
    h = hidden.reshape(-1, H)
    for _ in range(model.n_layers):
        gi = x @ model.weight_ih.T + model.bias_ih
        gh = h @ model.weight_hh.T + model.bias_hh
        r = jax.nn.sigmoid(gi[:, :H] + gh[:, :H])
        z = jax.nn.sigmoid(gi[:, H:2 * H] + gh[:, H:2 * H])
        n = jnp.tanh(gi[:, 2 * H:] + r * gh[:, 2 * H:])
        h = (1.0 - z) * n + z * h
        x = h
    return x[None], h[None]


if __name__ == "__main__":
    key = jax.random.PRNGKey(0)
    k_tok, k_hid, k_params = jax.random.split(key, 3)

    VOCAB = 16     # input_size
    HIDDEN = 32    # hidden_size
    SEQ = 8        # number of token ids fed to forward()
    N_LAYERS = 2

    model = EncoderRnnPallas(VOCAB, HIDDEN, n_layers=N_LAYERS, key=k_params)

    input_ids = jax.random.randint(k_tok, (SEQ,), 0, VOCAB, dtype=jnp.int32)
    hidden0 = jax.random.normal(k_hid, (1, SEQ, HIDDEN), jnp.float32)

    out, hid = model(input_ids, hidden0)
    out, hid = jax.block_until_ready((out, hid))

    ref_out, ref_hid = _reference_forward(model, input_ids, hidden0)
    assert out.shape == (1, SEQ, HIDDEN) and hid.shape == (1, SEQ, HIDDEN)
    # bf16 matmul operands vs f32 reference -> allow ~1e-2 level divergence
    assert jnp.allclose(out, ref_out, atol=5e-2), "output mismatch vs reference"
    assert jnp.allclose(hid, ref_hid, atol=5e-2), "hidden mismatch vs reference"

    print("KERNEL_OK")
</pallas_src>

<mosaic_0001>
module attributes {stable_mosaic.version = 11 : i64} {
  func.func @_encoder_kernel_onehot(%arg0: i32, %arg1: memref<16x1xi32, #tpu.memory_space<vmem>>, %arg2: memref<128x128xbf16, #tpu.memory_space<vmem>>, %arg3: memref<16x128xf32, #tpu.memory_space<vmem>>, %arg4: memref<128x384xbf16, #tpu.memory_space<vmem>>, %arg5: memref<128x384xbf16, #tpu.memory_space<vmem>>, %arg6: memref<128x512xbf16, #tpu.memory_space<vmem>>, %arg7: memref<1x384xf32, #tpu.memory_space<vmem>>, %arg8: memref<1x512xf32, #tpu.memory_space<vmem>>, %arg9: memref<1x128xf32, #tpu.memory_space<vmem>>, %arg10: memref<16x128xf32, #tpu.memory_space<vmem>>) attributes {dimension_semantics = [#tpu.dimension_semantics<parallel>], iteration_bounds = array<i64: 1>, scalar_prefetch = 0 : i64, scratch_operands = 0 : i64, tpu.core_type = #tpu.core_type<tc>, window_params = [{transform_indices = @transform_0, window_bounds = array<i64: 16, 1>}, {pipeline_mode = #tpu.pipeline_mode<synchronous>, transform_indices = @transform_1, window_bounds = array<i64: 128, 128>}, {transform_indices = @transform_2, window_bounds = array<i64: 16, 128>}, {pipeline_mode = #tpu.pipeline_mode<synchronous>, transform_indices = @transform_3, window_bounds = array<i64: 128, 384>}, {pipeline_mode = #tpu.pipeline_mode<synchronous>, transform_indices = @transform_4, window_bounds = array<i64: 128, 384>}, {pipeline_mode = #tpu.pipeline_mode<synchronous>, transform_indices = @transform_5, window_bounds = array<i64: 128, 512>}, {pipeline_mode = #tpu.pipeline_mode<synchronous>, transform_indices = @transform_6, window_bounds = array<i64: 1, 384>}, {pipeline_mode = #tpu.pipeline_mode<synchronous>, transform_indices = @transform_7, window_bounds = array<i64: 1, 512>}, {pipeline_mode = #tpu.pipeline_mode<synchronous>, transform_indices = @transform_8, window_bounds = array<i64: 1, 128>}, {transform_indices = @transform_9, window_bounds = array<i64: 16, 128>}]} {
    %c0 = arith.constant 0 : index
    %c0_0 = arith.constant 0 : index
    %0 = vector.load %arg1[%c0, %c0_0] : memref<16x1xi32, #tpu.memory_space<vmem>>, vector<16x1xi32>
    %1 = tpu.iota {dimensions = array<i32: 1>} : vector<16x128xi32>
    %2 = vector.broadcast %0 : vector<16x1xi32> to vector<16x128xi32>
    %3 = arith.cmpi eq, %2, %1 : vector<16x128xi32>
    %cst = arith.constant 1.000000e+00 : f32
    %cst_1 = arith.constant 0.000000e+00 : f32
    %4 = vector.broadcast %cst : f32 to vector<16x128xf32>
    %5 = vector.broadcast %cst_1 : f32 to vector<16x128xf32>
    %6 = arith.select %3, %4, %5 : vector<16x128xi1>, vector<16x128xf32>
    %7 = arith.truncf %6 : vector<16x128xf32> to vector<16x128xbf16>
    %c0_2 = arith.constant 0 : index
    %c0_3 = arith.constant 0 : index
    %8 = vector.load %arg2[%c0_2, %c0_3] : memref<128x128xbf16, #tpu.memory_space<vmem>>, vector<128x128xbf16>
    %cst_4 = arith.constant dense<0.000000e+00> : vector<16x128xf32>
    %9 = tpu.matmul %7, %8, %cst_4 {dimension_numbers = #tpu.dot_dimension_numbers<[1], [0], [0], [1], [0, 0, 1, 1], [], []>} : vector<16x128xbf16>, vector<128x128xbf16>, vector<16x128xf32> -> vector<16x128xf32>
    %10 = arith.truncf %9 : vector<16x128xf32> to vector<16x128xbf16>
    %c0_5 = arith.constant 0 : index
    %c0_6 = arith.constant 0 : index
    %11 = vector.load %arg3[%c0_5, %c0_6] : memref<16x128xf32, #tpu.memory_space<vmem>>, vector<16x128xf32>
    %c0_7 = arith.constant 0 : index
    %c0_8 = arith.constant 0 : index
    %12 = vector.load %arg4[%c0_7, %c0_8] : memref<128x384xbf16, #tpu.memory_space<vmem>>, vector<128x384xbf16>
    %c0_9 = arith.constant 0 : index
    %c0_10 = arith.constant 0 : index
    %13 = vector.load %arg5[%c0_9, %c0_10] : memref<128x384xbf16, #tpu.memory_space<vmem>>, vector<128x384xbf16>
    %c0_11 = arith.constant 0 : index
    %c0_12 = arith.constant 0 : index
    %14 = vector.load %arg6[%c0_11, %c0_12] : memref<128x512xbf16, #tpu.memory_space<vmem>>, vector<128x512xbf16>
    %c0_13 = arith.constant 0 : index
    %c0_14 = arith.constant 0 : index
    %15 = vector.load %arg7[%c0_13, %c0_14] : memref<1x384xf32, #tpu.memory_space<vmem>>, vector<1x384xf32>
    %c0_15 = arith.constant 0 : index
    %c0_16 = arith.constant 0 : index
    %16 = vector.load %arg8[%c0_15, %c0_16] : memref<1x512xf32, #tpu.memory_space<vmem>>, vector<1x512xf32>
    %c0_17 = arith.constant 0 : index
    %c0_18 = arith.constant 0 : index
    %17 = vector.load %arg9[%c0_17, %c0_18] : memref<1x128xf32, #tpu.memory_space<vmem>>, vector<1x128xf32>
    %18 = arith.truncf %11 : vector<16x128xf32> to vector<16x128xbf16>
    %cst_19 = arith.constant dense<0.000000e+00> : vector<16x384xf32>
    %19 = tpu.matmul %18, %13, %cst_19 {dimension_numbers = #tpu.dot_dimension_numbers<[1], [0], [0], [1], [0, 0, 1, 1], [], []>} : vector<16x128xbf16>, vector<128x384xbf16>, vector<16x384xf32> -> vector<16x384xf32>
    %cst_20 = arith.constant dense<0.000000e+00> : vector<16x384xf32>
    %20 = tpu.matmul %10, %12, %cst_20 {dimension_numbers = #tpu.dot_dimension_numbers<[1], [0], [0], [1], [0, 0, 1, 1], [], []>} : vector<16x128xbf16>, vector<128x384xbf16>, vector<16x384xf32> -> vector<16x384xf32>
    %21 = vector.broadcast %15 : vector<1x384xf32> to vector<16x384xf32>
    %22 = arith.addf %20, %21 : vector<16x384xf32>
    %23 = vector.extract_strided_slice %22 {offsets = [0, 0], sizes = [16, 128], strides = [1, 1]} : vector<16x384xf32> to vector<16x128xf32>
    %24 = vector.extract_strided_slice %19 {offsets = [0, 0], sizes = [16, 128], strides = [1, 1]} : vector<16x384xf32> to vector<16x128xf32>
    %25 = arith.addf %23, %24 : vector<16x128xf32>
    %26 = arith.negf %25 : vector<16x128xf32>
    %27 = math.exp %26 : vector<16x128xf32>
    %cst_21 = arith.constant 1.000000e+00 : f32
    %28 = vector.broadcast %cst_21 : f32 to vector<16x128xf32>
    %29 = arith.addf %28, %27 : vector<16x128xf32>
    %30 = arith.divf %28, %29 : vector<16x128xf32>
    %31 = vector.extract_strided_slice %22 {offsets = [0, 128], sizes = [16, 128], strides = [1, 1]} : vector<16x384xf32> to vector<16x128xf32>
    %32 = vector.extract_strided_slice %19 {offsets = [0, 128], sizes = [16, 128], strides = [1, 1]} : vector<16x384xf32> to vector<16x128xf32>
    %33 = arith.addf %31, %32 : vector<16x128xf32>
    %34 = arith.negf %33 : vector<16x128xf32>
    %35 = math.exp %34 : vector<16x128xf32>
    %cst_22 = arith.constant 1.000000e+00 : f32
    %36 = vector.broadcast %cst_22 : f32 to vector<16x128xf32>
    %37 = arith.addf %36, %35 : vector<16x128xf32>
    %38 = arith.divf %36, %37 : vector<16x128xf32>
    %39 = vector.extract_strided_slice %22 {offsets = [0, 256], sizes = [16, 128], strides = [1, 1]} : vector<16x384xf32> to vector<16x128xf32>
    %40 = vector.extract_strided_slice %19 {offsets = [0, 256], sizes = [16, 128], strides = [1, 1]} : vector<16x384xf32> to vector<16x128xf32>
    %41 = vector.broadcast %17 : vector<1x128xf32> to vector<16x128xf32>
    %42 = arith.addf %40, %41 : vector<16x128xf32>
    %43 = arith.mulf %30, %42 : vector<16x128xf32>
    %44 = arith.addf %39, %43 : vector<16x128xf32>
    %45 = math.tanh %44 : vector<16x128xf32>
    %cst_23 = arith.constant 1.000000e+00 : f32
    %46 = vector.broadcast %cst_23 : f32 to vector<16x128xf32>
    %47 = arith.subf %46, %38 : vector<16x128xf32>
    %48 = arith.mulf %47, %45 : vector<16x128xf32>
    %49 = arith.mulf %38, %11 : vector<16x128xf32>
    %50 = arith.addf %48, %49 : vector<16x128xf32>
    %c0_i32 = arith.constant 0 : i32
    %51 = arith.truncf %50 : vector<16x128xf32> to vector<16x128xbf16>
    %cst_24 = arith.constant dense<0.000000e+00> : vector<16x512xf32>
    %52 = tpu.matmul %51, %14, %cst_24 {dimension_numbers = #tpu.dot_dimension_numbers<[1], [0], [0], [1], [0, 0, 1, 1], [], []>} : vector<16x128xbf16>, vector<128x512xbf16>, vector<16x512xf32> -> vector<16x512xf32>
    %53 = vector.broadcast %16 : vector<1x512xf32> to vector<16x512xf32>
    %54 = arith.addf %52, %53 : vector<16x512xf32>
    %55 = vector.extract_strided_slice %54 {offsets = [0, 0], sizes = [16, 128], strides = [1, 1]} : vector<16x512xf32> to vector<16x128xf32>
    %56 = arith.negf %55 : vector<16x128xf32>
    %57 = math.exp %56 : vector<16x128xf32>
    %cst_25 = arith.constant 1.000000e+00 : f32
    %58 = vector.broadcast %cst_25 : f32 to vector<16x128xf32>
    %59 = arith.addf %58, %57 : vector<16x128xf32>
    %60 = arith.divf %58, %59 : vector<16x128xf32>
    %61 = vector.extract_strided_slice %54 {offsets = [0, 128], sizes = [16, 128], strides = [1, 1]} : vector<16x512xf32> to vector<16x128xf32>
    %62 = arith.negf %61 : vector<16x128xf32>
    %63 = math.exp %62 : vector<16x128xf32>
    %cst_26 = arith.constant 1.000000e+00 : f32
    %64 = vector.broadcast %cst_26 : f32 to vector<16x128xf32>
    %65 = arith.addf %64, %63 : vector<16x128xf32>
    %66 = arith.divf %64, %65 : vector<16x128xf32>
    %67 = vector.extract_strided_slice %54 {offsets = [0, 256], sizes = [16, 128], strides = [1, 1]} : vector<16x512xf32> to vector<16x128xf32>
    %68 = vector.extract_strided_slice %54 {offsets = [0, 384], sizes = [16, 128], strides = [1, 1]} : vector<16x512xf32> to vector<16x128xf32>
    %69 = arith.mulf %60, %68 : vector<16x128xf32>
    %70 = arith.addf %67, %69 : vector<16x128xf32>
    %71 = math.tanh %70 : vector<16x128xf32>
    %cst_27 = arith.constant 1.000000e+00 : f32
    %72 = vector.broadcast %cst_27 : f32 to vector<16x128xf32>
    %73 = arith.subf %72, %66 : vector<16x128xf32>
    %74 = arith.mulf %73, %71 : vector<16x128xf32>
    %75 = arith.mulf %66, %50 : vector<16x128xf32>
    %76 = arith.addf %74, %75 : vector<16x128xf32>
    %c0_28 = arith.constant 0 : index
    %c0_29 = arith.constant 0 : index
    %77 = vector.load %arg10[%c0_28, %c0_29] : memref<16x128xf32, #tpu.memory_space<vmem>>, vector<16x128xf32>
    tpu.vector_store %arg10[%c0_28, %c0_29], %76 {strides = array<i32>} : memref<16x128xf32, #tpu.memory_space<vmem>>, vector<16x128xf32>,
    return
  }
  func.func @transform_0(%arg0: i32) -> (i32, i32) {
    %c0_i32 = arith.constant 0 : i32
    %c0_i32_0 = arith.constant 0 : i32
    return %arg0, %c0_i32 : i32, i32
  }
  func.func @transform_1(%arg0: i32) -> (i32, i32) {
    %c0_i32 = arith.constant 0 : i32
    %c0_i32_0 = arith.constant 0 : i32
    %c0_i32_1 = arith.constant 0 : i32
    return %c0_i32, %c0_i32_0 : i32, i32
  }
  func.func @transform_2(%arg0: i32) -> (i32, i32) {
    %c0_i32 = arith.constant 0 : i32
    %c0_i32_0 = arith.constant 0 : i32
    return %arg0, %c0_i32 : i32, i32
  }
  func.func @transform_3(%arg0: i32) -> (i32, i32) {
    %c0_i32 = arith.constant 0 : i32
    %c0_i32_0 = arith.constant 0 : i32
    %c0_i32_1 = arith.constant 0 : i32
    return %c0_i32, %c0_i32_0 : i32, i32
  }
  func.func @transform_4(%arg0: i32) -> (i32, i32) {
    %c0_i32 = arith.constant 0 : i32
    %c0_i32_0 = arith.constant 0 : i32
    %c0_i32_1 = arith.constant 0 : i32
    return %c0_i32, %c0_i32_0 : i32, i32
  }
  func.func @transform_5(%arg0: i32) -> (i32, i32) {
    %c0_i32 = arith.constant 0 : i32
    %c0_i32_0 = arith.constant 0 : i32
    %c0_i32_1 = arith.constant 0 : i32
    return %c0_i32, %c0_i32_0 : i32, i32
  }
  func.func @transform_6(%arg0: i32) -> (i32, i32) {
    %c0_i32 = arith.constant 0 : i32
    %c0_i32_0 = arith.constant 0 : i32
    %c0_i32_1 = arith.constant 0 : i32
    return %c0_i32, %c0_i32_0 : i32, i32
  }
  func.func @transform_7(%arg0: i32) -> (i32, i32) {
    %c0_i32 = arith.constant 0 : i32
    %c0_i32_0 = arith.constant 0 : i32
    %c0_i32_1 = arith.constant 0 : i32
    return %c0_i32, %c0_i32_0 : i32, i32
  }
  func.func @transform_8(%arg0: i32) -> (i32, i32) {
    %c0_i32 = arith.constant 0 : i32
    %c0_i32_0 = arith.constant 0 : i32
    %c0_i32_1 = arith.constant 0 : i32
    return %c0_i32, %c0_i32_0 : i32, i32
  }
  func.func @transform_9(%arg0: i32) -> (i32, i32) {
    %c0_i32 = arith.constant 0 : i32
    %c0_i32_0 = arith.constant 0 : i32
    return %arg0, %c0_i32 : i32, i32
  }
}

</mosaic_0001>

<llo_original>
// kernel: tpu_custom_call.1
$region0: #{tpu_custom_call.1}
  #allocation0 [shape = 'u32[]', space=smem, size = 0x4, offset = 0x4, fixed_abs, tag = 'smem constant byte address 0x4 - core index']
  #allocation1 [shape = 'u32[144,128]{1,0:T(1,128)}', space=vmem, size = 0x12000, scoped, tag = 'internal scratch']
  %s0 = inlined_call_operand.vmem [shape: s32[16,1], index: 0, kind: input, shape index: {}]
  %s1 = inlined_call_operand.hbm [shape: bf16[128,128], index: 1, kind: input, shape index: {}]
  %s2 = inlined_call_operand.vmem [shape: f32[16,128], index: 2, kind: input, shape index: {}]
  %s3 = inlined_call_operand.hbm [shape: bf16[128,384], index: 3, kind: input, shape index: {}]
  %s4 = inlined_call_operand.hbm [shape: bf16[128,384], index: 4, kind: input, shape index: {}]
  %s5 = inlined_call_operand.hbm [shape: bf16[128,512], index: 5, kind: input, shape index: {}]
  %s6 = inlined_call_operand.vmem [shape: f32[1,384], index: 6, kind: input, shape index: {}]
  %s7 = inlined_call_operand.vmem [shape: f32[1,512], index: 7, kind: input, shape index: {}]
  %s8 = inlined_call_operand.vmem [shape: f32[1,128], index: 8, kind: input, shape index: {}]
  %s9 = inlined_call_operand.hbm [shape: f32[16,128], index: 9, kind: output, shape index: {}]
  %s10 = sld [smem:[#allocation0]]
  $region62: #{tpu_custom_call.1} parent=0
    _
  %s12 = ssub.s32 1, %s10
  %s13 = scalar_select 0, %s12, %s10
  $region1: #{tpu_custom_call.1} parent=0
    #allocation2 [shape = 'u8[32768]{0}', space=vmem, size = 0x8000, scoped, tag = 'input window, operand 1, single buffered']
    #allocation3 [shape = 's32[1]{0}', space=sflag, size = 0x4, scoped, tag = 'scoped memory for tpu_custom_call.1']
    #allocation4 [shape = 's32[1]{0}', space=sflag, size = 0x4, scoped, tag = 'scoped memory for tpu_custom_call.1']
    #allocation5 [shape = 'u8[98304]{0}', space=vmem, size = 0x18000, scoped, tag = 'input window, operand 3, single buffered']
    #allocation6 [shape = 's32[1]{0}', space=sflag, size = 0x4, scoped, tag = 'scoped memory for tpu_custom_call.1']
    #allocation7 [shape = 'u8[98304]{0}', space=vmem, size = 0x18000, scoped, tag = 'input window, operand 4, single buffered']
    #allocation8 [shape = 'u8[131072]{0}', space=vmem, size = 0x20000, scoped, tag = 'input window, operand 5, single buffered']
    #allocation9 [shape = 's32[1]{0}', space=sflag, size = 0x4, scoped, tag = 'scoped memory for tpu_custom_call.1']
    #allocation10 [shape = 'u8[8192]{0}', space=vmem, size = 0x2000, scoped, tag = 'output window, operand 0, single buffered']
    %14 = vsyncpa [#allocation3], 0
    %15 = vsyncpa [#allocation6], 0
    %16 = vsyncpa [#allocation9], 0
    %17 = vsyncpa [#allocation4], 0
    // Predicated region
    $region2: #{tpu_custom_call.1} parent=1 // pred_check
      _
    $region3: #{tpu_custom_call.1} parent=1 // pred_check_branch
      %19 = sbr.rel (0) target = $region5
    $region4: #{tpu_custom_call.1} parent=1 // pred_region
      _
    $region5: #{tpu_custom_call.1} parent=1 // pred_fallthru
      _
    // Predicated region
    $region6: #{tpu_custom_call.1} parent=1 // pred_check
      _
    $region7: #{tpu_custom_call.1} parent=1 // pred_check_branch
      %21 = sbr.rel (0) target = $region9
    $region8: #{tpu_custom_call.1} parent=1 // pred_region
      %s23 = ssub.s32 1024, 1024
      %24 = vsyncadd [#allocation3], %s23
      %s25 = sshll.u32 [#allocation2], 4
      %s26 = int_to_ptr.vmem [resolvable:$true] %s25
      %31 = dma.hbm_to_vmem [thread:$0]  %s1, 1024, %s26, [#allocation3], 64, 64, 4
    $region9: #{tpu_custom_call.1} parent=1 // pred_fallthru
      _
    // Predicated region
    $region10: #{tpu_custom_call.1} parent=1 // pred_check
      _
    $region11: #{tpu_custom_call.1} parent=1 // pred_check_branch
      %33 = sbr.rel (0) target = $region13
    $region12: #{tpu_custom_call.1} parent=1 // pred_region
      _
    $region13: #{tpu_custom_call.1} parent=1 // pred_fallthru
      _
    // Predicated region
    $region14: #{tpu_custom_call.1} parent=1 // pred_check
      _
    $region15: #{tpu_custom_call.1} parent=1 // pred_check_branch
      %35 = sbr.rel (0) target = $region17
    $region16: #{tpu_custom_call.1} parent=1 // pred_region
      %s37 = ssub.s32 3072, 3072
      %38 = vsyncadd [#allocation6], %s37
      %s39 = sshll.u32 [#allocation5], 4
      %s40 = int_to_ptr.vmem [resolvable:$true] %s39
      %45 = dma.hbm_to_vmem [thread:$0]  %s3, 3072, %s40, [#allocation6], 192, 192, 12
    $region17: #{tpu_custom_call.1} parent=1 // pred_fallthru
      _
    // Predicated region
    $region18: #{tpu_custom_call.1} parent=1 // pred_check
      _
    $region19: #{tpu_custom_call.1} parent=1 // pred_check_branch
      %47 = sbr.rel (0) target = $region21
    $region20: #{tpu_custom_call.1} parent=1 // pred_region
      %s49 = ssub.s32 3072, 3072
      %50 = vsyncadd [#allocation6], %s49
      %s51 = sshll.u32 [#allocation7], 4
      %s52 = int_to_ptr.vmem [resolvable:$true] %s51
      %57 = dma.hbm_to_vmem [thread:$0]  %s4, 3072, %s52, [#allocation6], 192, 192, 12
    $region21: #{tpu_custom_call.1} parent=1 // pred_fallthru
      _
    // Predicated region
    $region22: #{tpu_custom_call.1} parent=1 // pred_check
      _
    $region23: #{tpu_custom_call.1} parent=1 // pred_check_branch
      %59 = sbr.rel (0) target = $region25
    $region24: #{tpu_custom_call.1} parent=1 // pred_region
      %s61 = ssub.s32 4096, 4096
      %62 = vsyncadd [#allocation9], %s61
      %s63 = sshll.u32 [#allocation8], 4
      %s64 = int_to_ptr.vmem [resolvable:$true] %s63
      %69 = dma.hbm_to_vmem [thread:$0]  %s5, 4096, %s64, [#allocation9], 256, 256, 16
    $region25: #{tpu_custom_call.1} parent=1 // pred_fallthru
      _
    // Predicated region
    $region26: #{tpu_custom_call.1} parent=1 // pred_check
      _
    $region27: #{tpu_custom_call.1} parent=1 // pred_check_branch
      %71 = sbr.rel (0) target = $region29
    $region28: #{tpu_custom_call.1} parent=1 // pred_region
      _
    $region29: #{tpu_custom_call.1} parent=1 // pred_fallthru
      _
    // Predicated region
    $region30: #{tpu_custom_call.1} parent=1 // pred_check
      _
    $region31: #{tpu_custom_call.1} parent=1 // pred_check_branch
      %73 = sbr.rel (0) target = $region33
    $region32: #{tpu_custom_call.1} parent=1 // pred_region
      _
    $region33: #{tpu_custom_call.1} parent=1 // pred_fallthru
      _
    // Predicated region
    $region34: #{tpu_custom_call.1} parent=1 // pred_check
      _
    $region35: #{tpu_custom_call.1} parent=1 // pred_check_branch
      %75 = sbr.rel (0) target = $region37
    $region36: #{tpu_custom_call.1} parent=1 // pred_region
      _
    $region37: #{tpu_custom_call.1} parent=1 // pred_fallthru
      _
    // Predicated region
    $region38: #{tpu_custom_call.1} parent=1 // pred_check
      _
    $region39: #{tpu_custom_call.1} parent=1 // pred_check_branch
      %77 = sbr.rel (0) target = $region41
    $region40: #{tpu_custom_call.1} parent=1 // pred_region
      %78 = dma.done [#allocation3], 1024
    $region41: #{tpu_custom_call.1} parent=1 // pred_fallthru
      _
    // Predicated region
    $region42: #{tpu_custom_call.1} parent=1 // pred_check
      _
    $region43: #{tpu_custom_call.1} parent=1 // pred_check_branch
      %80 = sbr.rel (0) target = $region45
    $region44: #{tpu_custom_call.1} parent=1 // pred_region
      %81 = dma.done [#allocation6], 3072
    $region45: #{tpu_custom_call.1} parent=1 // pred_fallthru
      _
    // Predicated region
    $region46: #{tpu_custom_call.1} parent=1 // pred_check
      _
    $region47: #{tpu_custom_call.1} parent=1 // pred_check_branch
      %83 = sbr.rel (0) target = $region49
    $region48: #{tpu_custom_call.1} parent=1 // pred_region
      %84 = dma.done [#allocation6], 3072
    $region49: #{tpu_custom_call.1} parent=1 // pred_fallthru
      _
    // Predicated region
    $region50: #{tpu_custom_call.1} parent=1 // pred_check
      _
    $region51: #{tpu_custom_call.1} parent=1 // pred_check_branch
      %86 = sbr.rel (0) target = $region53
    $region52: #{tpu_custom_call.1} parent=1 // pred_region
      %87 = dma.done [#allocation9], 4096
    $region53: #{tpu_custom_call.1} parent=1 // pred_fallthru
      _
    %v89 = vld [vmem:[%s0] sm:$0xff]
    %v90 = vld [vmem:[%s0 + $0x8] sm:$0xff]
    %v91 = vlaneseq
    %v92 = vand.u32 %v91, 127
    %93 = vset.pattern.permute.xlu0 0
    %94 = vperm.xlu0 %93, %v89
    %v95 = vpop.permute.xlu0 %94
    %96 = vset.pattern.permute.xlu0 0
    %97 = vperm.xlu0 %96, %v90
    %v98 = vpop.permute.xlu0 %97
    %vm99 = vcmp.eq.s32.totalorder %v95, %v92
    %vm100 = vcmp.eq.s32.totalorder %v98, %v92
    %v101 = vsel %vm99, 1.0, 0.0
    %v102 = vsel %vm100, 1.0, 0.0
    %v103 = vpack.c.bf16 %v102, %v101
    %v104 = vld [vmem:[#allocation2] sm:$0xf]
    %v105 = vld [vmem:[#allocation2 + $0x4] sm:$0xf]
    %v106 = vld [vmem:[#allocation2 + $0x8] sm:$0xf]
    %v107 = vld [vmem:[#allocation2 + $0xc] sm:$0xf]
    %v108 = vld [vmem:[#allocation2 + $0x10] sm:$0xf]
    %v109 = vld [vmem:[#allocation2 + $0x14] sm:$0xf]
    %v110 = vld [vmem:[#allocation2 + $0x18] sm:$0xf]
    %v111 = vld [vmem:[#allocation2 + $0x1c] sm:$0xf]
    %v112 = vld [vmem:[#allocation2 + $0x20] sm:$0xf]
    %v113 = vld [vmem:[#allocation2 + $0x24] sm:$0xf]
    %v114 = vld [vmem:[#allocation2 + $0x28] sm:$0xf]
    %v115 = vld [vmem:[#allocation2 + $0x2c] sm:$0xf]
    %v116 = vld [vmem:[#allocation2 + $0x30] sm:$0xf]
    %v117 = vld [vmem:[#allocation2 + $0x34] sm:$0xf]
    %v118 = vld [vmem:[#allocation2 + $0x38] sm:$0xf]
    %v119 = vld [vmem:[#allocation2 + $0x3c] sm:$0xf]
    %v136 = vunpack.c.l.b16 %v104
    %v137 = vunpack.c.l.b16 %v105
    %v138 = vunpack.c.l.b16 %v106
    %v139 = vunpack.c.l.b16 %v107
    %v140 = vunpack.c.l.b16 %v108
    %v141 = vunpack.c.l.b16 %v109
    %v142 = vunpack.c.l.b16 %v110
    %v143 = vunpack.c.l.b16 %v111
    %v144 = vunpack.c.l.b16 %v112
    %v145 = vunpack.c.l.b16 %v113
    %v146 = vunpack.c.l.b16 %v114
    %v147 = vunpack.c.l.b16 %v115
    %v148 = vunpack.c.l.b16 %v116
    %v149 = vunpack.c.l.b16 %v117
    %v150 = vunpack.c.l.b16 %v118
    %v151 = vunpack.c.l.b16 %v119
    %v152 = vpack.c.b16 %v137, %v136
    %v153 = vpack.c.b16 %v139, %v138
    %v154 = vpack.c.b16 %v141, %v140
    %v155 = vpack.c.b16 %v143, %v142
    %v156 = vpack.c.b16 %v145, %v144
    %v157 = vpack.c.b16 %v147, %v146
    %v158 = vpack.c.b16 %v149, %v148
    %v159 = vpack.c.b16 %v151, %v150
    %168 = vmatprep.subr.bf16.mxu0 0
    %169 = vmatpush1.bf16.msra.mxu0 %v152
    %170 = vmatprep.subr.bf16.mxu0 0
    %171 = vmatpush1.bf16.msra.mxu0 %v153
    %172 = vmatprep.subr.bf16.mxu0 0
    %173 = vmatpush1.bf16.msra.mxu0 %v154
    %174 = vmatprep.subr.bf16.mxu0 0
    %175 = vmatpush1.bf16.msra.mxu0 %v155
    %176 = vmatprep.subr.bf16.mxu0 0
    %177 = vmatpush1.bf16.msra.mxu0 %v156
    %178 = vmatprep.subr.bf16.mxu0 0
    %179 = vmatpush1.bf16.msra.mxu0 %v157
    %180 = vmatprep.subr.bf16.mxu0 0
    %181 = vmatpush1.bf16.msra.mxu0 %v158
    %182 = vmatprep.subr.bf16.mxu0 0
    %183 = vmatpush1.bf16.msra.mxu0 %v159
    %184 = vmatprep.subr.bf16.mxu0 0
    %185 = vmatpush1.bf16.msra.mxu0 0
    %186 = vmatprep.subr.bf16.mxu0 0
    %187 = vmatpush1.bf16.msra.mxu0 0
    %188 = vmatprep.subr.bf16.mxu0 0
    %189 = vmatpush1.bf16.msra.mxu0 0
    %190 = vmatprep.subr.bf16.mxu0 0
    %191 = vmatpush1.bf16.msra.mxu0 0
    %192 = vmatprep.subr.bf16.mxu0 0
    %193 = vmatpush1.bf16.msra.mxu0 0
    %194 = vmatprep.subr.bf16.mxu0 0
    %195 = vmatpush1.bf16.msra.mxu0 0
    %196 = vmatprep.subr.bf16.mxu0 0
    %197 = vmatpush1.bf16.msra.mxu0 0
    %198 = vmatprep.subr.bf16.mxu0 0
    %199 = vmatpush1.bf16.msra.mxu0 0
    %200 = vmatprep.mubr.bf16.mxu0 0
    %201 = vmatmul.mubr.bf16.gmra.mrb[0].mxu0 %v103
    %v202 = vpop.f32.mrb[0].mxu0
    %v203 = vadd.f32 0.0, %v202
    %v204 = vpop.f32.mrb[0].mxu0
    %v205 = vpop.f32.mrb[0].mxu0
    %v206 = vadd.f32 0.0, %v205
    %v207 = vpop.f32.mrb[0].mxu0
    %208 = vdwg.mxu0
    %v209 = vpack.c.bf16 %v206, %v203
    %v210 = vld [vmem:[%s2] sm:$0xff]
    %v211 = vld [vmem:[%s2 + $0x8] sm:$0xff]
    %v212 = vld [vmem:[#allocation5] sm:$0xff]
    %v213 = vld [vmem:[#allocation5 + $0x8] sm:$0xf]
    %v214 = vld [vmem:[#allocation5 + $0xc] sm:$0xff]
    %v215 = vld [vmem:[#allocation5 + $0x14] sm:$0xf]
    %v216 = vld [vmem:[#allocation5 + $0x18] sm:$0xff]
    %v217 = vld [vmem:[#allocation5 + $0x20] sm:$0xf]
    %v218 = vld [vmem:[#allocation5 + $0x24] sm:$0xff]
    %v219 = vld [vmem:[#allocation5 + $0x2c] sm:$0xf]
    %v220 = vld [vmem:[#allocation5 + $0x30] sm:$0xff]
    %v221 = vld [vmem:[#allocation5 + $0x38] sm:$0xf]
    %v222 = vld [vmem:[#allocation5 + $0x3c] sm:$0xff]
    %v223 = vld [vmem:[#allocation5 + $0x44] sm:$0xf]
    %v224 = vld [vmem:[#allocation5 + $0x48] sm:$0xff]
    %v225 = vld [vmem:[#allocation5 + $0x50] sm:$0xf]
    %v226 = vld [vmem:[#allocation5 + $0x54] sm:$0xff]
    %v227 = vld [vmem:[#allocation5 + $0x5c] sm:$0xf]
    %v228 = vld [vmem:[#allocation5 + $0x60] sm:$0xff]
    %v229 = vld [vmem:[#allocation5 + $0x68] sm:$0xf]
    %v230 = vld [vmem:[#allocation5 + $0x6c] sm:$0xff]
    %v231 = vld [vmem:[#allocation5 + $0x74] sm:$0xf]
    %v232 = vld [vmem:[#allocation5 + $0x78] sm:$0xff]
    %v233 = vld [vmem:[#allocation5 + $0x80] sm:$0xf]
    %v234 = vld [vmem:[#allocation5 + $0x84] sm:$0xff]
    %v235 = vld [vmem:[#allocation5 + $0x8c] sm:$0xf]
    %v236 = vld [vmem:[#allocation5 + $0x90] sm:$0xff]
    %v237 = vld [vmem:[#allocation5 + $0x98] sm:$0xf]
    %v238 = vld [vmem:[#allocation5 + $0x9c] sm:$0xff]
    %v239 = vld [vmem:[#allocation5 + $0xa4] sm:$0xf]
    %v240 = vld [vmem:[#allocation5 + $0xa8] sm:$0xff]
    %v241 = vld [vmem:[#allocation5 + $0xb0] sm:$0xf]
    %v242 = vld [vmem:[#allocation5 + $0xb4] sm:$0xff]
    %v243 = vld [vmem:[#allocation5 + $0xbc] sm:$0xf]
    %v244 = vld [vmem:[#allocation7] sm:$0xff]
    %v245 = vld [vmem:[#allocation7 + $0x8] sm:$0xf]
    %v246 = vld [vmem:[#allocation7 + $0xc] sm:$0xff]
    %v247 = vld [vmem:[#allocation7 + $0x14] sm:$0xf]
    %v248 = vld [vmem:[#allocation7 + $0x18] sm:$0xff]
    %v249 = vld [vmem:[#allocation7 + $0x20] sm:$0xf]
    %v250 = vld [vmem:[#allocation7 + $0x24] sm:$0xff]
    %v251 = vld [vmem:[#allocation7 + $0x2c] sm:$0xf]
    %v252 = vld [vmem:[#allocation7 + $0x30] sm:$0xff]
    %v253 = vld [vmem:[#allocation7 + $0x38] sm:$0xf]
    %v254 = vld [vmem:[#allocation7 + $0x3c] sm:$0xff]
    %v255 = vld [vmem:[#allocation7 + $0x44] sm:$0xf]
    %v256 = vld [vmem:[#allocation7 + $0x48] sm:$0xff]
    %v257 = vld [vmem:[#allocation7 + $0x50] sm:$0xf]
    %v258 = vld [vmem:[#allocation7 + $0x54] sm:$0xff]
    %v259 = vld [vmem:[#allocation7 + $0x5c] sm:$0xf]
    %v260 = vld [vmem:[#allocation7 + $0x60] sm:$0xff]
    %v261 = vld [vmem:[#allocation7 + $0x68] sm:$0xf]
    %v262 = vld [vmem:[#allocation7 + $0x6c] sm:$0xff]
    %v263 = vld [vmem:[#allocation7 + $0x74] sm:$0xf]
    %v264 = vld [vmem:[#allocation7 + $0x78] sm:$0xff]
    %v265 = vld [vmem:[#allocation7 + $0x80] sm:$0xf]
    %v266 = vld [vmem:[#allocation7 + $0x84] sm:$0xff]
    %v267 = vld [vmem:[#allocation7 + $0x8c] sm:$0xf]
    %v268 = vld [vmem:[#allocation7 + $0x90] sm:$0xff]
    %v269 = vld [vmem:[#allocation7 + $0x98] sm:$0xf]
    %v270 = vld [vmem:[#allocation7 + $0x9c] sm:$0xff]
    %v271 = vld [vmem:[#allocation7 + $0xa4] sm:$0xf]
    %v272 = vld [vmem:[#allocation7 + $0xa8] sm:$0xff]
    %v273 = vld [vmem:[#allocation7 + $0xb0] sm:$0xf]
    %v274 = vld [vmem:[#allocation7 + $0xb4] sm:$0xff]
    %v275 = vld [vmem:[#allocation7 + $0xbc] sm:$0xf]
    %v276 = vld [vmem:[#allocation8] sm:$0xff]
    %v277 = vld [vmem:[#allocation8 + $0x8] sm:$0xff]
    %v278 = vld [vmem:[#allocation8 + $0x10] sm:$0xff]
    %v279 = vld [vmem:[#allocation8 + $0x18] sm:$0xff]
    %v280 = vld [vmem:[#allocation8 + $0x20] sm:$0xff]
    %v281 = vld [vmem:[#allocation8 + $0x28] sm:$0xff]
    %v282 = vld [vmem:[#allocation8 + $0x30] sm:$0xff]
    %v283 = vld [vmem:[#allocation8 + $0x38] sm:$0xff]
    %v284 = vld [vmem:[#allocation8 + $0x40] sm:$0xff]
    %v285 = vld [vmem:[#allocation8 + $0x48] sm:$0xff]
    %v286 = vld [vmem:[#allocation8 + $0x50] sm:$0xff]
    %v287 = vld [vmem:[#allocation8 + $0x58] sm:$0xff]
    %v288 = vld [vmem:[#allocation8 + $0x60] sm:$0xff]
    %v289 = vld [vmem:[#allocation8 + $0x68] sm:$0xff]
    %v290 = vld [vmem:[#allocation8 + $0x70] sm:$0xff]
    %v291 = vld [vmem:[#allocation8 + $0x78] sm:$0xff]
    %v292 = vld [vmem:[#allocation8 + $0x80] sm:$0xff]
    %v293 = vld [vmem:[#allocation8 + $0x88] sm:$0xff]
    %v294 = vld [vmem:[#allocation8 + $0x90] sm:$0xff]
    %v295 = vld [vmem:[#allocation8 + $0x98] sm:$0xff]
    %v296 = vld [vmem:[#allocation8 + $0xa0] sm:$0xff]
    %v297 = vld [vmem:[#allocation8 + $0xa8] sm:$0xff]
    %v298 = vld [vmem:[#allocation8 + $0xb0] sm:$0xff]
    %v299 = vld [vmem:[#allocation8 + $0xb8] sm:$0xff]
    %v300 = vld [vmem:[#allocation8 + $0xc0] sm:$0xff]
    %v301 = vld [vmem:[#allocation8 + $0xc8] sm:$0xff]
    %v302 = vld [vmem:[#allocation8 + $0xd0] sm:$0xff]
    %v303 = vld [vmem:[#allocation8 + $0xd8] sm:$0xff]
    %v304 = vld [vmem:[#allocation8 + $0xe0] sm:$0xff]
    %v305 = vld [vmem:[#allocation8 + $0xe8] sm:$0xff]
    %v306 = vld [vmem:[#allocation8 + $0xf0] sm:$0xff]
    %v307 = vld [vmem:[#allocation8 + $0xf8] sm:$0xff]
    %v308 = vld [vmem:[%s6] sm:$0x7]
    %v309 = vld [vmem:[%s7] sm:$0xf]
    %v310 = vld [vmem:[%s8] sm:$0x1]
    %v311 = vpack.c.bf16 %v211, %v210
    %v344 = vunpack.c.l.b16 %v244
    %v345 = vunpack.c.h.b16 %v244
    %v346 = vunpack.c.l.b16 %v245
    %v347 = vunpack.c.l.b16 %v246
    %v348 = vunpack.c.h.b16 %v246
    %v349 = vunpack.c.l.b16 %v247
    %v350 = vunpack.c.l.b16 %v248
    %v351 = vunpack.c.h.b16 %v248
    %v352 = vunpack.c.l.b16 %v249
    %v353 = vunpack.c.l.b16 %v250
    %v354 = vunpack.c.h.b16 %v250
    %v355 = vunpack.c.l.b16 %v251
    %v356 = vunpack.c.l.b16 %v252
    %v357 = vunpack.c.h.b16 %v252
    %v358 = vunpack.c.l.b16 %v253
    %v359 = vunpack.c.l.b16 %v254
    %v360 = vunpack.c.h.b16 %v254
    %v361 = vunpack.c.l.b16 %v255
    %v362 = vunpack.c.l.b16 %v256
    %v363 = vunpack.c.h.b16 %v256
    %v364 = vunpack.c.l.b16 %v257
    %v365 = vunpack.c.l.b16 %v258
    %v366 = vunpack.c.h.b16 %v258
    %v367 = vunpack.c.l.b16 %v259
    %v368 = vunpack.c.l.b16 %v260
    %v369 = vunpack.c.h.b16 %v260
    %v370 = vunpack.c.l.b16 %v261
    %v371 = vunpack.c.l.b16 %v262
    %v372 = vunpack.c.h.b16 %v262
    %v373 = vunpack.c.l.b16 %v263
    %v374 = vunpack.c.l.b16 %v264
    %v375 = vunpack.c.h.b16 %v264
    %v376 = vunpack.c.l.b16 %v265
    %v377 = vunpack.c.l.b16 %v266
    %v378 = vunpack.c.h.b16 %v266
    %v379 = vunpack.c.l.b16 %v267
    %v380 = vunpack.c.l.b16 %v268
    %v381 = vunpack.c.h.b16 %v268
    %v382 = vunpack.c.l.b16 %v269
    %v383 = vunpack.c.l.b16 %v270
    %v384 = vunpack.c.h.b16 %v270
    %v385 = vunpack.c.l.b16 %v271
    %v386 = vunpack.c.l.b16 %v272
    %v387 = vunpack.c.h.b16 %v272
    %v388 = vunpack.c.l.b16 %v273
    %v389 = vunpack.c.l.b16 %v274
    %v390 = vunpack.c.h.b16 %v274
    %v391 = vunpack.c.l.b16 %v275
    %v392 = vpack.c.b16 %v347, %v344
    %v393 = vpack.c.b16 %v348, %v345
    %v394 = vpack.c.b16 %v349, %v346
    %v395 = vpack.c.b16 %v353, %v350
    %v396 = vpack.c.b16 %v354, %v351
    %v397 = vpack.c.b16 %v355, %v352
    %v398 = vpack.c.b16 %v359, %v356
    %v399 = vpack.c.b16 %v360, %v357
    %v400 = vpack.c.b16 %v361, %v358
    %v401 = vpack.c.b16 %v365, %v362
    %v402 = vpack.c.b16 %v366, %v363
    %v403 = vpack.c.b16 %v367, %v364
    %v404 = vpack.c.b16 %v371, %v368
    %v405 = vpack.c.b16 %v372, %v369
    %v406 = vpack.c.b16 %v373, %v370
    %v407 = vpack.c.b16 %v377, %v374
    %v408 = vpack.c.b16 %v378, %v375
    %v409 = vpack.c.b16 %v379, %v376
    %v410 = vpack.c.b16 %v383, %v380
    %v411 = vpack.c.b16 %v384, %v381
    %v412 = vpack.c.b16 %v385, %v382
    %v413 = vpack.c.b16 %v389, %v386
    %v414 = vpack.c.b16 %v390, %v387
    %v415 = vpack.c.b16 %v391, %v388
    %440 = vmatprep.subr.bf16.mxu0 %v393
    %441 = vmatpush1.bf16.msra.mxu0 %v392
    %442 = vmatprep.subr.bf16.mxu0 %v396
    %443 = vmatpush1.bf16.msra.mxu0 %v395
    %444 = vmatprep.subr.bf16.mxu0 %v399
    %445 = vmatpush1.bf16.msra.mxu0 %v398
    %446 = vmatprep.subr.bf16.mxu0 %v402
    %447 = vmatpush1.bf16.msra.mxu0 %v401
    %448 = vmatprep.subr.bf16.mxu0 %v405
    %449 = vmatpush1.bf16.msra.mxu0 %v404
    %450 = vmatprep.subr.bf16.mxu0 %v408
    %451 = vmatpush1.bf16.msra.mxu0 %v407
    %452 = vmatprep.subr.bf16.mxu0 %v411
    %453 = vmatpush1.bf16.msra.mxu0 %v410
    %454 = vmatprep.subr.bf16.mxu0 %v414
    %455 = vmatpush1.bf16.msra.mxu0 %v413
    %456 = vmatprep.subr.bf16.mxu0 0
    %457 = vmatpush1.bf16.msra.mxu0 0
    %458 = vmatprep.subr.bf16.mxu0 0
    %459 = vmatpush1.bf16.msra.mxu0 0
    %460 = vmatprep.subr.bf16.mxu0 0
    %461 = vmatpush1.bf16.msra.mxu0 0
    %462 = vmatprep.subr.bf16.mxu0 0
    %463 = vmatpush1.bf16.msra.mxu0 0
    %464 = vmatprep.subr.bf16.mxu0 0
    %465 = vmatpush1.bf16.msra.mxu0 0
    %466 = vmatprep.subr.bf16.mxu0 0
    %467 = vmatpush1.bf16.msra.mxu0 0
    %468 = vmatprep.subr.bf16.mxu0 0
    %469 = vmatpush1.bf16.msra.mxu0 0
    %470 = vmatprep.subr.bf16.mxu0 0
    %471 = vmatpush1.bf16.msra.mxu0 0
    %472 = vmatprep.mubr.bf16.mxu0 0
    %473 = vmatmul.mubr.bf16.gmra.mrb[0].mxu0 %v311
    %v474 = vpop.f32.mrb[0].mxu0
    %v475 = vadd.f32 0.0, %v474
    %v476 = vpop.f32.mrb[0].mxu0
    %v477 = vadd.f32 0.0, %v476
    %v478 = vpop.f32.mrb[0].mxu0
    %v479 = vadd.f32 0.0, %v478
    %v480 = vpop.f32.mrb[0].mxu0
    %v481 = vadd.f32 0.0, %v480
    %482 = vdwg.mxu0
    %483 = vmatprep.subr.bf16.mxu0 0
    %484 = vmatpush1.bf16.msra.mxu0 %v394
    %485 = vmatprep.subr.bf16.mxu0 0
    %486 = vmatpush1.bf16.msra.mxu0 %v397
    %487 = vmatprep.subr.bf16.mxu0 0
    %488 = vmatpush1.bf16.msra.mxu0 %v400
    %489 = vmatprep.subr.bf16.mxu0 0
    %490 = vmatpush1.bf16.msra.mxu0 %v403
    %491 = vmatprep.subr.bf16.mxu0 0
    %492 = vmatpush1.bf16.msra.mxu0 %v406
    %493 = vmatprep.subr.bf16.mxu0 0
    %494 = vmatpush1.bf16.msra.mxu0 %v409
    %495 = vmatprep.subr.bf16.mxu0 0
    %496 = vmatpush1.bf16.msra.mxu0 %v412
    %497 = vmatprep.subr.bf16.mxu0 0
    %498 = vmatpush1.bf16.msra.mxu0 %v415
    %499 = vmatprep.subr.bf16.mxu0 0
    %500 = vmatpush1.bf16.msra.mxu0 0
    %501 = vmatprep.subr.bf16.mxu0 0
    %502 = vmatpush1.bf16.msra.mxu0 0
    %503 = vmatprep.subr.bf16.mxu0 0
    %504 = vmatpush1.bf16.msra.mxu0 0
    %505 = vmatprep.subr.bf16.mxu0 0
    %506 = vmatpush1.bf16.msra.mxu0 0
    %507 = vmatprep.subr.bf16.mxu0 0
    %508 = vmatpush1.bf16.msra.mxu0 0
    %509 = vmatprep.subr.bf16.mxu0 0
    %510 = vmatpush1.bf16.msra.mxu0 0
    %511 = vmatprep.subr.bf16.mxu0 0
    %512 = vmatpush1.bf16.msra.mxu0 0
    %513 = vmatprep.subr.bf16.mxu0 0
    %514 = vmatpush1.bf16.msra.mxu0 0
    %515 = vmatprep.mubr.bf16.mxu0 0
    %516 = vmatmul.mubr.bf16.gmra.mrb[0].mxu0 %v311
    %v517 = vpop.f32.mrb[0].mxu0
    %v518 = vadd.f32 0.0, %v517
    %v519 = vpop.f32.mrb[0].mxu0
    %v520 = vpop.f32.mrb[0].mxu0
    %v521 = vadd.f32 0.0, %v520
    %v522 = vpop.f32.mrb[0].mxu0
    %523 = vdwg.mxu0
    %v525 = vlaneseq
    %v526 = vshrl.u32 %v525, 7
    %v527 = vsub.s32 0, %v526
    %v528 = vrot.slane %v308, %v527
    %v529 = vlaneseq
    %v530 = vshrl.u32 %v529, 7
    %v531 = vsub.s32 1, %v530
    %v532 = vrot.slane %v308, %v531
    %v533 = vlaneseq
    %v534 = vshrl.u32 %v533, 7
    %v535 = vsub.s32 2, %v534
    %v536 = vrot.slane %v308, %v535
    %v572 = vunpack.c.l.b16 %v212
    %v573 = vunpack.c.h.b16 %v212
    %v574 = vunpack.c.l.b16 %v213
    %v575 = vunpack.c.l.b16 %v214
    %v576 = vunpack.c.h.b16 %v214
    %v577 = vunpack.c.l.b16 %v215
    %v578 = vunpack.c.l.b16 %v216
    %v579 = vunpack.c.h.b16 %v216
    %v580 = vunpack.c.l.b16 %v217
    %v581 = vunpack.c.l.b16 %v218
    %v582 = vunpack.c.h.b16 %v218
    %v583 = vunpack.c.l.b16 %v219
    %v584 = vunpack.c.l.b16 %v220
    %v585 = vunpack.c.h.b16 %v220
    %v586 = vunpack.c.l.b16 %v221
    %v587 = vunpack.c.l.b16 %v222
    %v588 = vunpack.c.h.b16 %v222
    %v589 = vunpack.c.l.b16 %v223
    %v590 = vunpack.c.l.b16 %v224
    %v591 = vunpack.c.h.b16 %v224
    %v592 = vunpack.c.l.b16 %v225
    %v593 = vunpack.c.l.b16 %v226
    %v594 = vunpack.c.h.b16 %v226
    %v595 = vunpack.c.l.b16 %v227
    %v596 = vunpack.c.l.b16 %v228
    %v597 = vunpack.c.h.b16 %v228
    %v598 = vunpack.c.l.b16 %v229
    %v599 = vunpack.c.l.b16 %v230
    %v600 = vunpack.c.h.b16 %v230
    %v601 = vunpack.c.l.b16 %v231
    %v602 = vunpack.c.l.b16 %v232
    %v603 = vunpack.c.h.b16 %v232
    %v604 = vunpack.c.l.b16 %v233
    %v605 = vunpack.c.l.b16 %v234
    %v606 = vunpack.c.h.b16 %v234
    %v607 = vunpack.c.l.b16 %v235
    %v608 = vunpack.c.l.b16 %v236
    %v609 = vunpack.c.h.b16 %v236
    %v610 = vunpack.c.l.b16 %v237
    %v611 = vunpack.c.l.b16 %v238
    %v612 = vunpack.c.h.b16 %v238
    %v613 = vunpack.c.l.b16 %v239
    %v614 = vunpack.c.l.b16 %v240
    %v615 = vunpack.c.h.b16 %v240
    %v616 = vunpack.c.l.b16 %v241
    %v617 = vunpack.c.l.b16 %v242
    %v618 = vunpack.c.h.b16 %v242
    %v619 = vunpack.c.l.b16 %v243
    %v620 = vpack.c.b16 %v575, %v572
    %v621 = vpack.c.b16 %v576, %v573
    %v622 = vpack.c.b16 %v577, %v574
    %v623 = vpack.c.b16 %v581, %v578
    %v624 = vpack.c.b16 %v582, %v579
    %v625 = vpack.c.b16 %v583, %v580
    %v626 = vpack.c.b16 %v587, %v584
    %v627 = vpack.c.b16 %v588, %v585
    %v628 = vpack.c.b16 %v589, %v586
    %v629 = vpack.c.b16 %v593, %v590
    %v630 = vpack.c.b16 %v594, %v591
    %v631 = vpack.c.b16 %v595, %v592
    %v632 = vpack.c.b16 %v599, %v596
    %v633 = vpack.c.b16 %v600, %v597
    %v634 = vpack.c.b16 %v601, %v598
    %v635 = vpack.c.b16 %v605, %v602
    %v636 = vpack.c.b16 %v606, %v603
    %v637 = vpack.c.b16 %v607, %v604
    %v638 = vpack.c.b16 %v611, %v608
    %v639 = vpack.c.b16 %v612, %v609
    %v640 = vpack.c.b16 %v613, %v610
    %v641 = vpack.c.b16 %v617, %v614
    %v642 = vpack.c.b16 %v618, %v615
    %v643 = vpack.c.b16 %v619, %v616
    %668 = vmatprep.subr.bf16.mxu0 %v621
    %669 = vmatpush1.bf16.msra.mxu0 %v620
    %670 = vmatprep.subr.bf16.mxu0 %v624
    %671 = vmatpush1.bf16.msra.mxu0 %v623
    %672 = vmatprep.subr.bf16.mxu0 %v627
    %673 = vmatpush1.bf16.msra.mxu0 %v626
    %674 = vmatprep.subr.bf16.mxu0 %v630
    %675 = vmatpush1.bf16.msra.mxu0 %v629
    %676 = vmatprep.subr.bf16.mxu0 %v633
    %677 = vmatpush1.bf16.msra.mxu0 %v632
    %678 = vmatprep.subr.bf16.mxu0 %v636
    %679 = vmatpush1.bf16.msra.mxu0 %v635
    %680 = vmatprep.subr.bf16.mxu0 %v639
    %681 = vmatpush1.bf16.msra.mxu0 %v638
    %682 = vmatprep.subr.bf16.mxu0 %v642
    %683 = vmatpush1.bf16.msra.mxu0 %v641
    %684 = vmatprep.subr.bf16.mxu0 0
    %685 = vmatpush1.bf16.msra.mxu0 0
    %686 = vmatprep.subr.bf16.mxu0 0
    %687 = vmatpush1.bf16.msra.mxu0 0
    %688 = vmatprep.subr.bf16.mxu0 0
    %689 = vmatpush1.bf16.msra.mxu0 0
    %690 = vmatprep.subr.bf16.mxu0 0
    %691 = vmatpush1.bf16.msra.mxu0 0
    %692 = vmatprep.subr.bf16.mxu0 0
    %693 = vmatpush1.bf16.msra.mxu0 0
    %694 = vmatprep.subr.bf16.mxu0 0
    %695 = vmatpush1.bf16.msra.mxu0 0
    %696 = vmatprep.subr.bf16.mxu0 0
    %697 = vmatpush1.bf16.msra.mxu0 0
    %698 = vmatprep.subr.bf16.mxu0 0
    %699 = vmatpush1.bf16.msra.mxu0 0
    %700 = vmatprep.mubr.bf16.mxu0 0
    %701 = vmatmul.mubr.bf16.gmra.mrb[0].mxu0 %v209
    %v702 = vpop.f32.mrb[0].mxu0
    %v703 = vadd.f32 %v528, %v702
    %v704 = vpop.f32.mrb[0].mxu0
    %v705 = vadd.f32 %v532, %v704
    %v706 = vpop.f32.mrb[0].mxu0
    %v707 = vadd.f32 %v528, %v706
    %v708 = vpop.f32.mrb[0].mxu0
    %v709 = vadd.f32 %v532, %v708
    %710 = vdwg.mxu0
    %711 = vmatprep.subr.bf16.mxu0 0
    %712 = vmatpush1.bf16.msra.mxu0 %v622
    %713 = vmatprep.subr.bf16.mxu0 0
    %714 = vmatpush1.bf16.msra.mxu0 %v625
    %715 = vmatprep.subr.bf16.mxu0 0
    %716 = vmatpush1.bf16.msra.mxu0 %v628
    %717 = vmatprep.subr.bf16.mxu0 0
    %718 = vmatpush1.bf16.msra.mxu0 %v631
    %719 = vmatprep.subr.bf16.mxu0 0
    %720 = vmatpush1.bf16.msra.mxu0 %v634
    %721 = vmatprep.subr.bf16.mxu0 0
    %722 = vmatpush1.bf16.msra.mxu0 %v637
    %723 = vmatprep.subr.bf16.mxu0 0
    %724 = vmatpush1.bf16.msra.mxu0 %v640
    %725 = vmatprep.subr.bf16.mxu0 0
    %726 = vmatpush1.bf16.msra.mxu0 %v643
    %727 = vmatprep.subr.bf16.mxu0 0
    %728 = vmatpush1.bf16.msra.mxu0 0
    %729 = vmatprep.subr.bf16.mxu0 0
    %730 = vmatpush1.bf16.msra.mxu0 0
    %731 = vmatprep.subr.bf16.mxu0 0
    %732 = vmatpush1.bf16.msra.mxu0 0
    %733 = vmatprep.subr.bf16.mxu0 0
    %734 = vmatpush1.bf16.msra.mxu0 0
    %735 = vmatprep.subr.bf16.mxu0 0
    %736 = vmatpush1.bf16.msra.mxu0 0
    %737 = vmatprep.subr.bf16.mxu0 0
    %738 = vmatpush1.bf16.msra.mxu0 0
    %739 = vmatprep.subr.bf16.mxu0 0
    %740 = vmatpush1.bf16.msra.mxu0 0
    %741 = vmatprep.subr.bf16.mxu0 0
    %742 = vmatpush1.bf16.msra.mxu0 0
    %743 = vmatprep.mubr.bf16.mxu0 0
    %744 = vmatmul.mubr.bf16.gmra.mrb[0].mxu0 %v209
    %v745 = vpop.f32.mrb[0].mxu0
    %v746 = vadd.f32 %v536, %v745
    %v747 = vpop.f32.mrb[0].mxu0
    %v748 = vpop.f32.mrb[0].mxu0
    %v749 = vadd.f32 %v536, %v748
    %v750 = vpop.f32.mrb[0].mxu0
    %751 = vdwg.mxu0
    %v752 = vadd.f32 %v703, %v475
    %v753 = vadd.f32 %v707, %v479
    %v754 = vxor.u32 %v752, 2147483648
    %v755 = vxor.u32 %v753, 2147483648
    %v756 = vmul.f32 %v754, 1.442695
    %v757 = vpow.pop %v756
    %v758 = vmul.f32 %v755, 1.442695
    %v759 = vpow.pop %v758
    %v760 = vadd.f32 %v757, 1.0
    %v761 = vadd.f32 %v759, 1.0
    %v762 = vrcp.pop %v760
    %v763 = vmul.f32 1.0, %v762
    %v764 = vrcp.pop %v761
    %v765 = vmul.f32 1.0, %v764
    %v766 = vadd.f32 %v705, %v477
    %v767 = vadd.f32 %v709, %v481
    %v768 = vxor.u32 %v766, 2147483648
    %v769 = vxor.u32 %v767, 2147483648
    %v770 = vmul.f32 %v768, 1.442695
    %v771 = vpow.pop %v770
    %v772 = vmul.f32 %v769, 1.442695
    %v773 = vpow.pop %v772
    %v774 = vadd.f32 %v771, 1.0
    %v775 = vadd.f32 %v773, 1.0
    %v776 = vrcp.pop %v774
    %v777 = vmul.f32 1.0, %v776
    %v778 = vrcp.pop %v775
    %v779 = vmul.f32 1.0, %v778
    %v781 = vlaneseq
    %v782 = vshrl.u32 %v781, 7
    %v783 = vsub.s32 0, %v782
    %v784 = vrot.slane %v310, %v783
    %v786 = vadd.f32 %v518, %v784
    %v787 = vadd.f32 %v521, %v784
    %v788 = vmul.f32 %v763, %v786
    %v789 = vmul.f32 %v765, %v787
    %v790 = vadd.f32 %v746, %v788
    %v791 = vadd.f32 %v749, %v789
    %v792 = vtanh.pop %v790
    %v793 = vtanh.pop %v791
    %v794 = vsub.f32 1.0, %v777
    %v795 = vsub.f32 1.0, %v779
    %v796 = vmul.f32 %v794, %v792
    %v797 = vmul.f32 %v795, %v793
    %v798 = vmul.f32 %v777, %v210
    %v799 = vmul.f32 %v779, %v211
    %v800 = vadd.f32 %v796, %v798
    %v801 = vadd.f32 %v797, %v799
    %v802 = vpack.c.bf16 %v801, %v800
    %v804 = vlaneseq
    %v805 = vshrl.u32 %v804, 7
    %v806 = vsub.s32 0, %v805
    %v807 = vrot.slane %v309, %v806
    %v808 = vlaneseq
    %v809 = vshrl.u32 %v808, 7
    %v810 = vsub.s32 1, %v809
    %v811 = vrot.slane %v309, %v810
    %v812 = vlaneseq
    %v813 = vshrl.u32 %v812, 7
    %v814 = vsub.s32 2, %v813
    %v815 = vrot.slane %v309, %v814
    %v816 = vlaneseq
    %v817 = vshrl.u32 %v816, 7
    %v818 = vsub.s32 3, %v817
    %v819 = vrot.slane %v309, %v818
    %v856 = vunpack.c.l.b16 %v276
    %v857 = vunpack.c.h.b16 %v276
    %v858 = vunpack.c.l.b16 %v277
    %v859 = vunpack.c.h.b16 %v277
    %v860 = vunpack.c.l.b16 %v278
    %v861 = vunpack.c.h.b16 %v278
    %v862 = vunpack.c.l.b16 %v279
    %v863 = vunpack.c.h.b16 %v279
    %v864 = vunpack.c.l.b16 %v280
    %v865 = vunpack.c.h.b16 %v280
    %v866 = vunpack.c.l.b16 %v281
    %v867 = vunpack.c.h.b16 %v281
    %v868 = vunpack.c.l.b16 %v282
    %v869 = vunpack.c.h.b16 %v282
    %v870 = vunpack.c.l.b16 %v283
    %v871 = vunpack.c.h.b16 %v283
    %v872 = vunpack.c.l.b16 %v284
    %v873 = vunpack.c.h.b16 %v284
    %v874 = vunpack.c.l.b16 %v285
    %v875 = vunpack.c.h.b16 %v285
    %v876 = vunpack.c.l.b16 %v286
    %v877 = vunpack.c.h.b16 %v286
    %v878 = vunpack.c.l.b16 %v287
    %v879 = vunpack.c.h.b16 %v287
    %v880 = vunpack.c.l.b16 %v288
    %v881 = vunpack.c.h.b16 %v288
    %v882 = vunpack.c.l.b16 %v289
    %v883 = vunpack.c.h.b16 %v289
    %v884 = vunpack.c.l.b16 %v290
    %v885 = vunpack.c.h.b16 %v290
    %v886 = vunpack.c.l.b16 %v291
    %v887 = vunpack.c.h.b16 %v291
    %v888 = vunpack.c.l.b16 %v292
    %v889 = vunpack.c.h.b16 %v292
    %v890 = vunpack.c.l.b16 %v293
    %v891 = vunpack.c.h.b16 %v293
    %v892 = vunpack.c.l.b16 %v294
    %v893 = vunpack.c.h.b16 %v294
    %v894 = vunpack.c.l.b16 %v295
    %v895 = vunpack.c.h.b16 %v295
    %v896 = vunpack.c.l.b16 %v296
    %v897 = vunpack.c.h.b16 %v296
    %v898 = vunpack.c.l.b16 %v297
    %v899 = vunpack.c.h.b16 %v297
    %v900 = vunpack.c.l.b16 %v298
    %v901 = vunpack.c.h.b16 %v298
    %v902 = vunpack.c.l.b16 %v299
    %v903 = vunpack.c.h.b16 %v299
    %v904 = vunpack.c.l.b16 %v300
    %v905 = vunpack.c.h.b16 %v300
    %v906 = vunpack.c.l.b16 %v301
    %v907 = vunpack.c.h.b16 %v301
    %v908 = vunpack.c.l.b16 %v302
    %v909 = vunpack.c.h.b16 %v302
    %v910 = vunpack.c.l.b16 %v303
    %v911 = vunpack.c.h.b16 %v303
    %v912 = vunpack.c.l.b16 %v304
    %v913 = vunpack.c.h.b16 %v304
    %v914 = vunpack.c.l.b16 %v305
    %v915 = vunpack.c.h.b16 %v305
    %v916 = vunpack.c.l.b16 %v306
    %v917 = vunpack.c.h.b16 %v306
    %v918 = vunpack.c.l.b16 %v307
    %v919 = vunpack.c.h.b16 %v307
    %v920 = vpack.c.b16 %v860, %v856
    %v921 = vpack.c.b16 %v861, %v857
    %v922 = vpack.c.b16 %v862, %v858
    %v923 = vpack.c.b16 %v863, %v859
    %v924 = vpack.c.b16 %v868, %v864
    %v925 = vpack.c.b16 %v869, %v865
    %v926 = vpack.c.b16 %v870, %v866
    %v927 = vpack.c.b16 %v871, %v867
    %v928 = vpack.c.b16 %v876, %v872
    %v929 = vpack.c.b16 %v877, %v873
    %v930 = vpack.c.b16 %v878, %v874
    %v931 = vpack.c.b16 %v879, %v875
    %v932 = vpack.c.b16 %v884, %v880
    %v933 = vpack.c.b16 %v885, %v881
    %v934 = vpack.c.b16 %v886, %v882
    %v935 = vpack.c.b16 %v887, %v883
    %v936 = vpack.c.b16 %v892, %v888
    %v937 = vpack.c.b16 %v893, %v889
    %v938 = vpack.c.b16 %v894, %v890
    %v939 = vpack.c.b16 %v895, %v891
    %v940 = vpack.c.b16 %v900, %v896
    %v941 = vpack.c.b16 %v901, %v897
    %v942 = vpack.c.b16 %v902, %v898
    %v943 = vpack.c.b16 %v903, %v899
    %v944 = vpack.c.b16 %v908, %v904
    %v945 = vpack.c.b16 %v909, %v905
    %v946 = vpack.c.b16 %v910, %v906
    %v947 = vpack.c.b16 %v911, %v907
    %v948 = vpack.c.b16 %v916, %v912
    %v949 = vpack.c.b16 %v917, %v913
    %v950 = vpack.c.b16 %v918, %v914
    %v951 = vpack.c.b16 %v919, %v915
    %984 = vmatprep.subr.bf16.mxu0 %v921
    %985 = vmatpush1.bf16.msra.mxu0 %v920
    %986 = vmatprep.subr.bf16.mxu0 %v925
    %987 = vmatpush1.bf16.msra.mxu0 %v924
    %988 = vmatprep.subr.bf16.mxu0 %v929
    %989 = vmatpush1.bf16.msra.mxu0 %v928
    %990 = vmatprep.subr.bf16.mxu0 %v933
    %991 = vmatpush1.bf16.msra.mxu0 %v932
    %992 = vmatprep.subr.bf16.mxu0 %v937
    %993 = vmatpush1.bf16.msra.mxu0 %v936
    %994 = vmatprep.subr.bf16.mxu0 %v941
    %995 = vmatpush1.bf16.msra.mxu0 %v940
    %996 = vmatprep.subr.bf16.mxu0 %v945
    %997 = vmatpush1.bf16.msra.mxu0 %v944
    %998 = vmatprep.subr.bf16.mxu0 %v949
    %999 = vmatpush1.bf16.msra.mxu0 %v948
    %1000 = vmatprep.subr.bf16.mxu0 0
    %1001 = vmatpush1.bf16.msra.mxu0 0
    %1002 = vmatprep.subr.bf16.mxu0 0
    %1003 = vmatpush1.bf16.msra.mxu0 0
    %1004 = vmatprep.subr.bf16.mxu0 0
    %1005 = vmatpush1.bf16.msra.mxu0 0
    %1006 = vmatprep.subr.bf16.mxu0 0
    %1007 = vmatpush1.bf16.msra.mxu0 0
    %1008 = vmatprep.subr.bf16.mxu0 0
    %1009 = vmatpush1.bf16.msra.mxu0 0
    %1010 = vmatprep.subr.bf16.mxu0 0
    %1011 = vmatpush1.bf16.msra.mxu0 0
    %1012 = vmatprep.subr.bf16.mxu0 0
    %1013 = vmatpush1.bf16.msra.mxu0 0
    %1014 = vmatprep.subr.bf16.mxu0 0
    %1015 = vmatpush1.bf16.msra.mxu0 0
    %1016 = vmatprep.mubr.bf16.mxu0 0
    %1017 = vmatmul.mubr.bf16.gmra.mrb[0].mxu0 %v802
    %v1018 = vpop.f32.mrb[0].mxu0
    %v1019 = vadd.f32 %v807, %v1018
    %v1020 = vpop.f32.mrb[0].mxu0
    %v1021 = vadd.f32 %v811, %v1020
    %v1022 = vpop.f32.mrb[0].mxu0
    %v1023 = vadd.f32 %v807, %v1022
    %v1024 = vpop.f32.mrb[0].mxu0
    %v1025 = vadd.f32 %v811, %v1024
    %1026 = vdwg.mxu0
    %1027 = vmatprep.subr.bf16.mxu0 %v923
    %1028 = vmatpush1.bf16.msra.mxu0 %v922
    %1029 = vmatprep.subr.bf16.mxu0 %v927
    %1030 = vmatpush1.bf16.msra.mxu0 %v926
    %1031 = vmatprep.subr.bf16.mxu0 %v931
    %1032 = vmatpush1.bf16.msra.mxu0 %v930
    %1033 = vmatprep.subr.bf16.mxu0 %v935
    %1034 = vmatpush1.bf16.msra.mxu0 %v934
    %1035 = vmatprep.subr.bf16.mxu0 %v939
    %1036 = vmatpush1.bf16.msra.mxu0 %v938
    %1037 = vmatprep.subr.bf16.mxu0 %v943
    %1038 = vmatpush1.bf16.msra.mxu0 %v942
    %1039 = vmatprep.subr.bf16.mxu0 %v947
    %1040 = vmatpush1.bf16.msra.mxu0 %v946
    %1041 = vmatprep.subr.bf16.mxu0 %v951
    %1042 = vmatpush1.bf16.msra.mxu0 %v950
    %1043 = vmatprep.subr.bf16.mxu0 0
    %1044 = vmatpush1.bf16.msra.mxu0 0
    %1045 = vmatprep.subr.bf16.mxu0 0
    %1046 = vmatpush1.bf16.msra.mxu0 0
    %1047 = vmatprep.subr.bf16.mxu0 0
    %1048 = vmatpush1.bf16.msra.mxu0 0
    %1049 = vmatprep.subr.bf16.mxu0 0
    %1050 = vmatpush1.bf16.msra.mxu0 0
    %1051 = vmatprep.subr.bf16.mxu0 0
    %1052 = vmatpush1.bf16.msra.mxu0 0
    %1053 = vmatprep.subr.bf16.mxu0 0
    %1054 = vmatpush1.bf16.msra.mxu0 0
    %1055 = vmatprep.subr.bf16.mxu0 0
    %1056 = vmatpush1.bf16.msra.mxu0 0
    %1057 = vmatprep.subr.bf16.mxu0 0
    %1058 = vmatpush1.bf16.msra.mxu0 0
    %1059 = vmatprep.mubr.bf16.mxu0 0
    %1060 = vmatmul.mubr.bf16.gmra.mrb[0].mxu0 %v802
    %v1061 = vpop.f32.mrb[0].mxu0
    %v1062 = vadd.f32 %v815, %v1061
    %v1063 = vpop.f32.mrb[0].mxu0
    %v1064 = vadd.f32 %v819, %v1063
    %v1065 = vpop.f32.mrb[0].mxu0
    %v1066 = vadd.f32 %v815, %v1065
    %v1067 = vpop.f32.mrb[0].mxu0
    %v1068 = vadd.f32 %v819, %v1067
    %1069 = vdwg.mxu0
    %v1070 = vxor.u32 %v1019, 2147483648
    %v1071 = vxor.u32 %v1023, 2147483648
    %v1072 = vmul.f32 %v1070, 1.442695
    %v1073 = vpow.pop %v1072
    %v1074 = vmul.f32 %v1071, 1.442695
    %v1075 = vpow.pop %v1074
    %v1076 = vadd.f32 %v1073, 1.0
    %v1077 = vadd.f32 %v1075, 1.0
    %v1078 = vrcp.pop %v1076
    %v1079 = vmul.f32 1.0, %v1078
    %v1080 = vrcp.pop %v1077
    %v1081 = vmul.f32 1.0, %v1080
    %v1082 = vxor.u32 %v1021, 2147483648
    %v1083 = vxor.u32 %v1025, 2147483648
    %v1084 = vmul.f32 %v1082, 1.442695
    %v1085 = vpow.pop %v1084
    %v1086 = vmul.f32 %v1083, 1.442695
    %v1087 = vpow.pop %v1086
    %v1088 = vadd.f32 %v1085, 1.0
    %v1089 = vadd.f32 %v1087, 1.0
    %v1090 = vrcp.pop %v1088
    %v1091 = vmul.f32 1.0, %v1090
    %v1092 = vrcp.pop %v1089
    %v1093 = vmul.f32 1.0, %v1092
    %v1094 = vmul.f32 %v1079, %v1064
    %v1095 = vmul.f32 %v1081, %v1068
    %v1096 = vadd.f32 %v1062, %v1094
    %v1097 = vadd.f32 %v1066, %v1095
    %v1098 = vtanh.pop %v1096
    %v1099 = vtanh.pop %v1097
    %v1100 = vsub.f32 1.0, %v1091
    %v1101 = vsub.f32 1.0, %v1093
    %v1102 = vmul.f32 %v1100, %v1098
    %v1103 = vmul.f32 %v1101, %v1099
    %v1104 = vmul.f32 %v1091, %v800
    %v1105 = vmul.f32 %v1093, %v801
    %v1106 = vadd.f32 %v1102, %v1104
    %v1107 = vadd.f32 %v1103, %v1105
    %1108 = vst [vmem:[#allocation10] sm:$0xff] %v1106
    %1109 = vst [vmem:[#allocation10 + $0x8] sm:$0xff] %v1107
    // Predicated region
    $region54: #{tpu_custom_call.1} parent=1 // pred_check
      _
    $region55: #{tpu_custom_call.1} parent=1 // pred_check_branch
      %1111 = sbr.rel (0) target = $region57
    $region56: #{tpu_custom_call.1} parent=1 // pred_region
      %s1113 = ssub.s32 256, 256
      %1114 = vsyncadd [#allocation4], %s1113
      %s1115 = sshll.u32 [#allocation10], 4
      %s1116 = int_to_ptr.vmem [resolvable:$true] %s1115
      %1121 = dma.vmem_to_hbm [thread:$0]  %s1116, 256, %s9, [#allocation4], 128, 128, 8
    $region57: #{tpu_custom_call.1} parent=1 // pred_fallthru
      _
    // Predicated region
    $region58: #{tpu_custom_call.1} parent=1 // pred_check
      _
    $region59: #{tpu_custom_call.1} parent=1 // pred_check_branch
      %1123 = sbr.rel (0) target = $region61
    $region60: #{tpu_custom_call.1} parent=1 // pred_region
      %1124 = dma.done [#allocation4], 256
    $region61: #{tpu_custom_call.1} parent=1 // pred_fallthru
      _
    %1125 = vsyncpa [#allocation3], 1
    %1126 = vsyncpa [#allocation6], 1
    %1127 = vsyncpa [#allocation9], 1
    %1128 = vsyncpa [#allocation4], 1

</llo_original>
